<compile_context>
chip_gen: v7x
topology: tpu7x:2x2x1
jax: 0.10.0
libtpu: 0.0.40
codegen_flags: <defaults>
</compile_context>

<pallas_src>
import functools
import math

import jax
import jax.numpy as jnp
from jax import lax
from jax.experimental import pallas as pl
from jax.experimental.pallas import tpu as pltpu


def _round_up(x, m):
    return ((x + m - 1) // m) * m


def _gelu(x, approx=False):
    if approx:
        # tanh approximation: single EUP transcendental per element (cheaper VALU-wise),
        # deviates from torch's default erf GELU by ~1e-3.
        c = math.sqrt(2.0 / math.pi)
        return 0.5 * x * (1.0 + jnp.tanh(c * (x + 0.044715 * x * x * x)))
    # exact erf-based GELU -> matches torch.nn.GELU() default
    return 0.5 * x * (1.0 + lax.erf(x * (1.0 / math.sqrt(2.0))))


# ---------------------------------------------------------------------------
# Kernels (channel-major: channels on sublanes, pixels on lanes)
# ---------------------------------------------------------------------------

def _ffn_kernel_fused(x_ref, w1t_ref, b1_ref, w2t_ref, b2_ref, o_ref, *, approx_gelu):
    # x_ref:   (dim, tpix)        pixel tile of one image, NCHW-native
    # w1t_ref: (inner, dim)       b1_ref: (inner, 1)
    # w2t_ref: (dim_out, inner)   b2_ref: (dim_out, 1)
    # o_ref:   (dim_out, tpix)
    h = jnp.dot(w1t_ref[...], x_ref[...], preferred_element_type=jnp.float32)
    h = _gelu(h + b1_ref[...].astype(jnp.float32), approx=approx_gelu)
    # TODO(synk): Dropout(p>0) not implemented; module default p=0.0 is the identity.
    y = jnp.dot(w2t_ref[...], h.astype(w2t_ref.dtype),
                preferred_element_type=jnp.float32)
    o_ref[...] = (y + b2_ref[...].astype(jnp.float32)).astype(o_ref.dtype)


def _ffn_kernel_split(x_ref, w1t_ref, b1_ref, w2t_ref, b2_ref, o_ref, acc_ref, *,
                      approx_gelu):
    # Fallback when W1/W2 cannot be fully VMEM-resident: inner dim split over the trailing
    # "arbitrary" grid axis with an f32 accumulator. (Weight blocks re-stream once per
    # pixel tile -- only used when the fused path does not fit the VMEM budget.)
    k = pl.program_id(2)

    @pl.when(k == 0)
    def _init():
        acc_ref[...] = jnp.zeros_like(acc_ref)

    h = jnp.dot(w1t_ref[...], x_ref[...], preferred_element_type=jnp.float32)
    h = _gelu(h + b1_ref[...].astype(jnp.float32), approx=approx_gelu)
    acc_ref[...] += jnp.dot(w2t_ref[...], h.astype(w2t_ref.dtype),
                            preferred_element_type=jnp.float32)

    @pl.when(k == pl.num_programs(2) - 1)
    def _finalize():
        o_ref[...] = (acc_ref[...] + b2_ref[...].astype(jnp.float32)).astype(o_ref.dtype)


# ---------------------------------------------------------------------------
# Wrapper
# ---------------------------------------------------------------------------

def _default_vmem_limit_bytes():
    """Generation-aware VMEM budget: ~96 MiB on 128 MiB parts (v5e/v6e), ~48 MiB on v7x."""
    cap = None
    try:
        cap = getattr(pltpu.get_tpu_info(), "vmem_capacity_bytes", None)
    except Exception:
        cap = None
    if not cap:
        cap = 64 * 1024 * 1024  # conservative (v7x-sized) fallback when undetectable
    return min(int(0.75 * cap), 100 * 1024 * 1024)


def feed_forward_pallas(x_nchw, w1, b1, w2, b2, *,
                        max_pixel_block=512,
                        max_inner_block=None,
                        approx_gelu=False,
                        cast_to_bf16=False,
                        vmem_limit_bytes=None):
    """FeedForward(dim, dim_out, mult, glu=False, dropout=0.0) forward pass.

    x_nchw: (B, dim, H, W); w1: (dim, inner); b1: (inner,);
    w2: (inner, dim_out); b2: (dim_out,). Returns (B, dim_out, H, W).
    """
    B, C, H, W = x_nchw.shape
    dim, inner = w1.shape
    inner2, dim_out = w2.shape
    assert C == dim and inner == inner2
    assert b1.shape == (inner,) and b2.shape == (dim_out,)

    if vmem_limit_bytes is None:
        vmem_limit_bytes = _default_vmem_limit_bytes()
    budget = int(0.85 * vmem_limit_bytes)  # headroom for Mosaic-internal scratch

    if cast_to_bf16:
        # Full-rate MXU operands; halves weight HBM/VMEM footprint. f32 accumulation kept.
        x_nchw = x_nchw.astype(jnp.bfloat16)
        w1, w2 = w1.astype(jnp.bfloat16), w2.astype(jnp.bfloat16)

    out_dtype = x_nchw.dtype
    x_itemsize = jnp.dtype(x_nchw.dtype).itemsize
    w_itemsize = jnp.dtype(w1.dtype).itemsize

    # Pre-orient weights once (tiny, one-time) so the kernel is pure channel-major matmuls.
    w1t = jnp.transpose(w1)          # (inner, dim)
    w2t = jnp.transpose(w2)          # (dim_out, inner)
    b1c = b1.reshape(inner, 1)
    b2c = b2.reshape(dim_out, 1)

    # --- pixel tiling (lane axis of every tile; multiple of 128 -> unmasked stores) ---
    HW = H * W
    tpix = min(_round_up(HW, 128), max(128, (max_pixel_block // 128) * 128))

    def fused_fits(tpix_):
        w_bytes = (inner * dim + dim_out * inner + inner + dim_out) * w_itemsize
        acts = 2 * (dim + dim_out) * tpix_ * x_itemsize        # double-buffered x / out tiles
        temps = (2 * inner + dim_out) * tpix_ * 4              # f32 h (+ GELU temps) and y
        return 2 * w_bytes + acts + temps <= budget            # 2x weights: pessimistic bufs

    use_split = max_inner_block is not None
    if not use_split:
        while tpix > 128 and not fused_fits(tpix):
            tpix -= 128
        use_split = not fused_fits(tpix)

    if use_split:
        if max_inner_block is None:
            tk = min(_round_up(inner, 128), 2048)
        else:
            tk = min(_round_up(max_inner_block, 128), _round_up(inner, 128))

        def split_fits(tk_, tpix_):
            # weight blocks assumed double-buffered (v7x-safe sizing)
            wblk = 2 * (tk_ * dim + dim_out * tk_ + tk_ + dim_out) * w_itemsize
            acts = 2 * (dim + dim_out) * tpix_ * x_itemsize
            temps = 2 * tk_ * tpix_ * 4 + dim_out * tpix_ * 4  # f32 h (+ temps) + accumulator
            return wblk + acts + temps <= budget

        while tk > 128 and not split_fits(tk, tpix):
            tk = max(128, _round_up(tk // 2, 128))
        while tpix > 128 and not split_fits(tk, tpix):
            tpix -= 128

        inner_pp = _round_up(inner, tk)
        nk = inner_pp // tk
        if inner_pp != inner:
            # zero padding keeps math exact: gelu(0)=0, padded W2 columns are zero
            w1t = jnp.pad(w1t, ((0, inner_pp - inner), (0, 0)))
            w2t = jnp.pad(w2t, ((0, 0), (0, inner_pp - inner)))
            b1c = jnp.pad(b1c, ((0, inner_pp - inner), (0, 0)))
    else:
        inner_pp, tk, nk = inner, None, 1

    HWp = _round_up(HW, tpix)
    npix = HWp // tpix

    # NCHW-native: a free reshape, plus a pixel-axis pad only when needed.
    x3 = x_nchw.reshape(B, dim, HW)
    if HWp != HW:
        x3 = jnp.pad(x3, ((0, 0), (0, 0), (0, HWp - HW)))

    # --- advisory cost estimate (includes weight re-streaming when the split path is used)
    flops = 2 * B * HWp * (dim * inner_pp + inner_pp * dim_out)
    transcendentals = B * HWp * inner_pp
    weight_bytes = (dim * inner_pp + inner_pp * dim_out + inner_pp + dim_out) * w_itemsize
    weight_streams = (B * npix) if (use_split and nk > 1) else 1
    bytes_accessed = (B * dim * HWp * x_itemsize
                      + B * dim_out * HWp * x_itemsize
                      + weight_streams * weight_bytes)
    cost = pl.CostEstimate(flops=int(flops), transcendentals=int(transcendentals),
                           bytes_accessed=int(bytes_accessed))

    out_shape = jax.ShapeDtypeStruct((B, dim_out, HWp), out_dtype)

    if not use_split:
        kernel = functools.partial(_ffn_kernel_fused, approx_gelu=approx_gelu)
        grid_spec = pltpu.PrefetchScalarGridSpec(
            num_scalar_prefetch=0,
            grid=(B, npix),
            in_specs=[
                pl.BlockSpec((None, dim, tpix), lambda b, j: (b, 0, j)),   # x tile
                pl.BlockSpec((inner, dim), lambda b, j: (0, 0)),           # W1^T (resident)
                pl.BlockSpec((inner, 1), lambda b, j: (0, 0)),             # b1  (resident)
                pl.BlockSpec((dim_out, inner), lambda b, j: (0, 0)),       # W2^T (resident)
                pl.BlockSpec((dim_out, 1), lambda b, j: (0, 0)),           # b2  (resident)
            ],
            out_specs=pl.BlockSpec((None, dim_out, tpix), lambda b, j: (b, 0, j)),
        )
        dim_sem = ("parallel", "parallel")
    else:
        kernel = functools.partial(_ffn_kernel_split, approx_gelu=approx_gelu)
        grid_spec = pltpu.PrefetchScalarGridSpec(
            num_scalar_prefetch=0,
            grid=(B, npix, nk),
            in_specs=[
                pl.BlockSpec((None, dim, tpix), lambda b, j, k: (b, 0, j)),
                pl.BlockSpec((tk, dim), lambda b, j, k: (k, 0)),
                pl.BlockSpec((tk, 1), lambda b, j, k: (k, 0)),
                pl.BlockSpec((dim_out, tk), lambda b, j, k: (0, k)),
                pl.BlockSpec((dim_out, 1), lambda b, j, k: (0, 0)),
            ],
            out_specs=pl.BlockSpec((None, dim_out, tpix), lambda b, j, k: (b, 0, j)),
            scratch_shapes=[pltpu.VMEM((dim_out, tpix), jnp.float32)],
        )
        dim_sem = ("parallel", "parallel", "arbitrary")

    out = pl.pallas_call(
        kernel,
        out_shape=out_shape,
        grid_spec=grid_spec,
        compiler_params=pltpu.CompilerParams(
            dimension_semantics=dim_sem,
            vmem_limit_bytes=vmem_limit_bytes),
        cost_estimate=cost,
    )(x3, w1t, b1c, w2t, b2c)

    if HWp != HW:
        out = out[:, :, :HW]
    return out.reshape(B, dim_out, H, W)


# ---------------------------------------------------------------------------
# Reference + params (PyTorch-style init) + self-test
# ---------------------------------------------------------------------------

def _reference(x_nchw, w1, b1, w2, b2):
    B, C, H, W = x_nchw.shape
    xr = jnp.transpose(x_nchw, (0, 2, 3, 1)).reshape(-1, C).astype(jnp.float32)
    h = _gelu(xr @ w1.astype(jnp.float32) + b1.astype(jnp.float32)[None, :])
    y = h @ w2.astype(jnp.float32) + b2.astype(jnp.float32)[None, :]
    return jnp.transpose(y.reshape(B, H, W, -1), (0, 3, 1, 2)).astype(x_nchw.dtype)


def _make_params(key, dim, mult=4, dim_out=None, dtype=jnp.float32):
    inner = int(dim * mult)
    dim_out = dim if dim_out is None else dim_out
    k1, k2, k3, k4 = jax.random.split(key, 4)
    # Conv2d(dim, inner, 1) weight stored as (dim, inner) matmul weight; PyTorch-style init.
    bound1 = 1.0 / math.sqrt(dim)
    w1 = jax.random.uniform(k1, (dim, inner), minval=-bound1, maxval=bound1, dtype=dtype)
    b1 = jax.random.uniform(k2, (inner,), minval=-bound1, maxval=bound1, dtype=dtype)
    bound2 = 1.0 / math.sqrt(inner)
    w2 = jax.random.uniform(k3, (inner, dim_out), minval=-bound2, maxval=bound2, dtype=dtype)
    b2 = jax.random.uniform(k4, (dim_out,), minval=-bound2, maxval=bound2, dtype=dtype)
    return w1, b1, w2, b2


if __name__ == "__main__":
    key = jax.random.PRNGKey(0)
    k0, k1, k2, k3 = jax.random.split(key, 4)

    # --- test 1: module-spec toy shape (B=2, dim=4, H=W=16, mult=4, dim_out=dim) ---
    # exercises the fused fast path (fully VMEM-resident weights, no reduction axis)
    B, dim, H, W = 2, 4, 16, 16
    x = jax.random.normal(k0, (B, dim, H, W), dtype=jnp.float32)
    w1, b1, w2, b2 = _make_params(k1, dim)
    y = jax.block_until_ready(feed_forward_pallas(x, w1, b1, w2, b2))
    y_ref = _reference(x, w1, b1, w2, b2)
    assert y.shape == (B, dim, H, W)
    assert jnp.allclose(y, y_ref, atol=1e-5, rtol=1e-5), float(jnp.max(jnp.abs(y - y_ref)))

    # --- test 2: exercise the split-inner fallback path (nk > 1, accumulator scratch) ---
    B2, dim2, H2, W2 = 1, 256, 8, 8
    x2 = jax.random.normal(k2, (B2, dim2, H2, W2), dtype=jnp.float32)
    w1b, b1b, w2b, b2b = _make_params(k3, dim2)
    y2 = jax.block_until_ready(
        feed_forward_pallas(x2, w1b, b1b, w2b, b2b, max_inner_block=256))
    y2_ref = _reference(x2, w1b, b1b, w2b, b2b)
    assert y2.shape == (B2, dim2, H2, W2)
    assert jnp.allclose(y2, y2_ref, atol=1e-4, rtol=1e-4), float(jnp.max(jnp.abs(y2 - y2_ref)))

    print("KERNEL_OK")
</pallas_src>

<mosaic_0001>
module attributes {stable_mosaic.version = 11 : i64} {
  func.func @_ffn_kernel_fused(%arg0: i32, %arg1: i32, %arg2: memref<1x4x256xf32, #tpu.memory_space<vmem>>, %arg3: memref<16x4xf32, #tpu.memory_space<vmem>>, %arg4: memref<16x1xf32, #tpu.memory_space<vmem>>, %arg5: memref<4x16xf32, #tpu.memory_space<vmem>>, %arg6: memref<4x1xf32, #tpu.memory_space<vmem>>, %arg7: memref<1x4x256xf32, #tpu.memory_space<vmem>>) attributes {dimension_semantics = [#tpu.dimension_semantics<parallel>, #tpu.dimension_semantics<parallel>], iteration_bounds = array<i64: 2, 1>, scalar_prefetch = 0 : i64, scratch_operands = 0 : i64, tpu.core_type = #tpu.core_type<tc>, window_params = [{transform_indices = @transform_0, window_bounds = array<i64: 1, 4, 256>}, {pipeline_mode = #tpu.pipeline_mode<synchronous>, transform_indices = @transform_1, window_bounds = array<i64: 16, 4>}, {pipeline_mode = #tpu.pipeline_mode<synchronous>, transform_indices = @transform_2, window_bounds = array<i64: 16, 1>}, {pipeline_mode = #tpu.pipeline_mode<synchronous>, transform_indices = @transform_3, window_bounds = array<i64: 4, 16>}, {pipeline_mode = #tpu.pipeline_mode<synchronous>, transform_indices = @transform_4, window_bounds = array<i64: 4, 1>}, {transform_indices = @transform_5, window_bounds = array<i64: 1, 4, 256>}]} {
    %c0 = arith.constant 0 : index
    %c0_0 = arith.constant 0 : index
    %0 = vector.load %arg3[%c0, %c0_0] : memref<16x4xf32, #tpu.memory_space<vmem>>, vector<16x4xf32>
    %c0_1 = arith.constant 0 : index
    %c0_2 = arith.constant 0 : index
    %c0_3 = arith.constant 0 : index
    %1 = vector.load %arg2[%c0_1, %c0_2, %c0_3] : memref<1x4x256xf32, #tpu.memory_space<vmem>>, vector<1x4x256xf32>
    %2 = vector.shape_cast %1 : vector<1x4x256xf32> to vector<4x256xf32>
    %cst = arith.constant dense<0.000000e+00> : vector<16x256xf32>
    %3 = tpu.matmul %0, %2, %cst {dimension_numbers = #tpu.dot_dimension_numbers<[1], [0], [0], [1], [0, 0, 1, 1], [], []>} : vector<16x4xf32>, vector<4x256xf32>, vector<16x256xf32> -> vector<16x256xf32>
    %c0_4 = arith.constant 0 : index
    %c0_5 = arith.constant 0 : index
    %4 = vector.load %arg4[%c0_4, %c0_5] : memref<16x1xf32, #tpu.memory_space<vmem>>, vector<16x1xf32>
    %5 = vector.broadcast %4 : vector<16x1xf32> to vector<16x256xf32>
    %6 = arith.addf %3, %5 : vector<16x256xf32>
    %cst_6 = arith.constant 5.000000e-01 : f32
    %7 = vector.broadcast %cst_6 : f32 to vector<16x256xf32>
    %8 = arith.mulf %7, %6 : vector<16x256xf32>
    %cst_7 = arith.constant 0.707106769 : f32
    %9 = vector.broadcast %cst_7 : f32 to vector<16x256xf32>
    %10 = arith.mulf %6, %9 : vector<16x256xf32>
    %11 = math.erf %10 : vector<16x256xf32>
    %cst_8 = arith.constant 1.000000e+00 : f32
    %12 = vector.broadcast %cst_8 : f32 to vector<16x256xf32>
    %13 = arith.addf %12, %11 : vector<16x256xf32>
    %14 = arith.mulf %8, %13 : vector<16x256xf32>
    %c0_9 = arith.constant 0 : index
    %c0_10 = arith.constant 0 : index
    %15 = vector.load %arg5[%c0_9, %c0_10] : memref<4x16xf32, #tpu.memory_space<vmem>>, vector<4x16xf32>
    %cst_11 = arith.constant dense<0.000000e+00> : vector<4x256xf32>
    %16 = tpu.matmul %15, %14, %cst_11 {dimension_numbers = #tpu.dot_dimension_numbers<[1], [0], [0], [1], [0, 0, 1, 1], [], []>} : vector<4x16xf32>, vector<16x256xf32>, vector<4x256xf32> -> vector<4x256xf32>
    %c0_12 = arith.constant 0 : index
    %c0_13 = arith.constant 0 : index
    %17 = vector.load %arg6[%c0_12, %c0_13] : memref<4x1xf32, #tpu.memory_space<vmem>>, vector<4x1xf32>
    %18 = vector.broadcast %17 : vector<4x1xf32> to vector<4x256xf32>
    %19 = arith.addf %16, %18 : vector<4x256xf32>
    %c0_14 = arith.constant 0 : index
    %c0_15 = arith.constant 0 : index
    %c0_16 = arith.constant 0 : index
    %20 = vector.load %arg7[%c0_14, %c0_15, %c0_16] : memref<1x4x256xf32, #tpu.memory_space<vmem>>, vector<1x4x256xf32>
    %21 = vector.shape_cast %20 : vector<1x4x256xf32> to vector<4x256xf32>
    %22 = vector.shape_cast %19 : vector<4x256xf32> to vector<1x4x256xf32>
    tpu.vector_store %arg7[%c0_14, %c0_15, %c0_16], %22 {strides = array<i32>} : memref<1x4x256xf32, #tpu.memory_space<vmem>>, vector<1x4x256xf32>,
    return
  }
  func.func @transform_0(%arg0: i32, %arg1: i32) -> (i32, i32, i32) {
    %c0_i32 = arith.constant 0 : i32
    %c0_i32_0 = arith.constant 0 : i32
    return %arg0, %c0_i32, %arg1 : i32, i32, i32
  }
  func.func @transform_1(%arg0: i32, %arg1: i32) -> (i32, i32) {
    %c0_i32 = arith.constant 0 : i32
    %c0_i32_0 = arith.constant 0 : i32
    %c0_i32_1 = arith.constant 0 : i32
    return %c0_i32, %c0_i32_0 : i32, i32
  }
  func.func @transform_2(%arg0: i32, %arg1: i32) -> (i32, i32) {
    %c0_i32 = arith.constant 0 : i32
    %c0_i32_0 = arith.constant 0 : i32
    %c0_i32_1 = arith.constant 0 : i32
    return %c0_i32, %c0_i32_0 : i32, i32
  }
  func.func @transform_3(%arg0: i32, %arg1: i32) -> (i32, i32) {
    %c0_i32 = arith.constant 0 : i32
    %c0_i32_0 = arith.constant 0 : i32
    %c0_i32_1 = arith.constant 0 : i32
    return %c0_i32, %c0_i32_0 : i32, i32
  }
  func.func @transform_4(%arg0: i32, %arg1: i32) -> (i32, i32) {
    %c0_i32 = arith.constant 0 : i32
    %c0_i32_0 = arith.constant 0 : i32
    %c0_i32_1 = arith.constant 0 : i32
    return %c0_i32, %c0_i32_0 : i32, i32
  }
  func.func @transform_5(%arg0: i32, %arg1: i32) -> (i32, i32, i32) {
    %c0_i32 = arith.constant 0 : i32
    %c0_i32_0 = arith.constant 0 : i32
    return %arg0, %c0_i32, %arg1 : i32, i32, i32
  }
}

</mosaic_0001>

<llo_original>
// kernel: tpu_custom_call.1
$region0: #{tpu_custom_call.1}
  #allocation0 [shape = 'u32[]', space=smem, size = 0x4, offset = 0x4, fixed_abs, tag = 'smem constant byte address 0x4 - core index']
  #allocation1 [shape = 'u32[144,128]{1,0:T(1,128)}', space=vmem, size = 0x12000, scoped, tag = 'internal scratch']
  %s0 = inlined_call_operand.vmem [shape: f32[2,4,256], index: 0, kind: input, shape index: {}]
  %s1 = inlined_call_operand.vmem [shape: f32[16,4], index: 1, kind: input, shape index: {}]
  %s2 = inlined_call_operand.vmem [shape: f32[16,1], index: 2, kind: input, shape index: {}]
  %s3 = inlined_call_operand.vmem [shape: f32[4,16], index: 3, kind: input, shape index: {}]
  %s4 = inlined_call_operand.vmem [shape: f32[4,1], index: 4, kind: input, shape index: {}]
  %s5 = inlined_call_operand.hbm [shape: f32[2,4,256], index: 5, kind: output, shape index: {}]
  %s6 = sld [smem:[#allocation0]]
  $region53: #{tpu_custom_call.1} parent=0
    _
  %s8 = ssub.s32 1, %s6
  %s9 = scalar_select 0, %s8, %s6
  $region1: #{tpu_custom_call.1} parent=0
    #allocation2 [shape = 'u8[8192]{0}', space=vmem, size = 0x2000, scoped, tag = 'output window, operand 0']
    #allocation3 [shape = 's32[2]{0}', space=sflag, size = 0x8, scoped, tag = 'scoped memory for tpu_custom_call.1']
    %10 = vsyncpa [#allocation3], 0
    %s11 = scalar_lea.sflag [#allocation3], 1
    %12 = vsyncpa %s11, 0
    loop: start=0, step=1, limit=4
    $region2: #{tpu_custom_call.1} parent=1 // loop_pre_header
      _
    $region3: #{tpu_custom_call.1} parent=1 // loop_header
      %s14 = sphi 0, %s18
      %p15 = scmp.ge.s32.totalorder %s14, 4
      %s21 = sphi 0, %s33
      %s22 = sphi 0, %s29
      %s23 = sphi 0, %s21
      %s24 = sphi 0, %s22
      %s25 = sphi 0, %s23
      %s26 = sphi 0, %s24
      %s38 = sphi 0, %s40
      %s41 = sphi 0, %s38
      %s42 = sphi 0, %s41
      %s58 = sphi 0, %s42
      %s62 = sphi 0, %s62
      %s64 = sphi 0, %s62
      %s65 = sphi 0, %s64
      %s79 = sphi 0, %s65
      %s83 = sphi 0, %s83
      %s85 = sphi 0, %s83
      %s86 = sphi 0, %s85
      %s100 = sphi 0, %s86
      %s104 = sphi 0, %s104
      %s106 = sphi 0, %s104
      %s107 = sphi 0, %s106
      %s121 = sphi 0, %s107
      %s125 = sphi 0, %s125
      %s127 = sphi 0, %s125
      %s128 = sphi 0, %s127
      %s142 = sphi 0, %s128
      %s150 = sphi 0, %s152
      %s153 = sphi 0, %s150
      %s154 = sphi 0, %s153
      %s170 = sphi 0, %s154
    $region4: #{tpu_custom_call.1} parent=1 // loop_header_branch
      %17 = sbr.rel (%p15) target = $region8
    $region5: #{tpu_custom_call.1} parent=1 // loop_body
      %s19 = ssub.s32 %s14, 1
      %s20 = ssub.s32 %s14, 2
      %s27 = sadd.s32 1, %s22
      %p28 = scmp.ge.s32.totalorder %s27, 1
      %s29 = scalar_select %p28, 0, %s27
      %s30 = sadd.s32 1, %s21
      %s31 = scalar_select %p28, %s30, %s21
      %p32 = scmp.ge.s32.totalorder %s31, 2
      %s33 = scalar_select %p32, 0, %s31
      %s34 = ssub.s32 %s21, %s33
      %s35 = ssub.s32 %s22, %s29
      %s36 = sor.u32 %s34, %s35
      %p37 = scmp.eq.s32.totalorder %s36, 0
      %s39 = sadd.s32 %s38, 1
      %s40 = scalar_select %p37, %s38, %s39
      %p43 = pneg %p37
      %p44 = scmp.eq.s32.totalorder %s14, 1
      %p45 = por %p43, %p44
      %p46 = scmp.ne.s32.totalorder %s38, %s41
      %p47 = scmp.eq.s32.totalorder %s14, 0
      %p48 = por %p46, %p47
      %p49 = scmp.ne.s32.totalorder %s38, %s41
      %p50 = scmp.eq.s32.totalorder %s19, 1
      %p51 = por %p49, %p50
      %p52 = scmp.ne.s32.totalorder %s41, %s42
      %p53 = scmp.eq.s32.totalorder %s19, 0
      %p54 = por %p52, %p53
      %p55 = scmp.ne.s32.totalorder %s41, %s42
      %p56 = scmp.eq.s32.totalorder %s20, 1
      %p57 = por %p55, %p56
      %p59 = scmp.ne.s32.totalorder %s42, %s58
      %p60 = scmp.eq.s32.totalorder %s20, 0
      %p61 = por %p59, %p60
      %s63 = sadd.s32 %s62, 1
      %p66 = scmp.eq.s32.totalorder %s14, 1
      %p67 = scmp.ne.s32.totalorder %s62, %s64
      %p68 = scmp.eq.s32.totalorder %s14, 0
      %p69 = por %p67, %p68
      %p70 = scmp.ne.s32.totalorder %s62, %s64
      %p71 = scmp.eq.s32.totalorder %s19, 1
      %p72 = por %p70, %p71
      %p73 = scmp.ne.s32.totalorder %s64, %s65
      %p74 = scmp.eq.s32.totalorder %s19, 0
      %p75 = por %p73, %p74
      %p76 = scmp.ne.s32.totalorder %s64, %s65
      %p77 = scmp.eq.s32.totalorder %s20, 1
      %p78 = por %p76, %p77
      %p80 = scmp.ne.s32.totalorder %s65, %s79
      %p81 = scmp.eq.s32.totalorder %s20, 0
      %p82 = por %p80, %p81
      %s84 = sadd.s32 %s83, 1
      %p87 = scmp.eq.s32.totalorder %s14, 1
      %p88 = scmp.ne.s32.totalorder %s83, %s85
      %p89 = scmp.eq.s32.totalorder %s14, 0
      %p90 = por %p88, %p89
      %p91 = scmp.ne.s32.totalorder %s83, %s85
      %p92 = scmp.eq.s32.totalorder %s19, 1
      %p93 = por %p91, %p92
      %p94 = scmp.ne.s32.totalorder %s85, %s86
      %p95 = scmp.eq.s32.totalorder %s19, 0
      %p96 = por %p94, %p95
      %p97 = scmp.ne.s32.totalorder %s85, %s86
      %p98 = scmp.eq.s32.totalorder %s20, 1
      %p99 = por %p97, %p98
      %p101 = scmp.ne.s32.totalorder %s86, %s100
      %p102 = scmp.eq.s32.totalorder %s20, 0
      %p103 = por %p101, %p102
      %s105 = sadd.s32 %s104, 1
      %p108 = scmp.eq.s32.totalorder %s14, 1
      %p109 = scmp.ne.s32.totalorder %s104, %s106
      %p110 = scmp.eq.s32.totalorder %s14, 0
      %p111 = por %p109, %p110
      %p112 = scmp.ne.s32.totalorder %s104, %s106
      %p113 = scmp.eq.s32.totalorder %s19, 1
      %p114 = por %p112, %p113
      %p115 = scmp.ne.s32.totalorder %s106, %s107
      %p116 = scmp.eq.s32.totalorder %s19, 0
      %p117 = por %p115, %p116
      %p118 = scmp.ne.s32.totalorder %s106, %s107
      %p119 = scmp.eq.s32.totalorder %s20, 1
      %p120 = por %p118, %p119
      %p122 = scmp.ne.s32.totalorder %s107, %s121
      %p123 = scmp.eq.s32.totalorder %s20, 0
      %p124 = por %p122, %p123
      %s126 = sadd.s32 %s125, 1
      %p129 = scmp.eq.s32.totalorder %s14, 1
      %p130 = scmp.ne.s32.totalorder %s125, %s127
      %p131 = scmp.eq.s32.totalorder %s14, 0
      %p132 = por %p130, %p131
      %p133 = scmp.ne.s32.totalorder %s125, %s127
      %p134 = scmp.eq.s32.totalorder %s19, 1
      %p135 = por %p133, %p134
      %p136 = scmp.ne.s32.totalorder %s127, %s128
      %p137 = scmp.eq.s32.totalorder %s19, 0
      %p138 = por %p136, %p137
      %p139 = scmp.ne.s32.totalorder %s127, %s128
      %p140 = scmp.eq.s32.totalorder %s20, 1
      %p141 = por %p139, %p140
      %p143 = scmp.ne.s32.totalorder %s128, %s142
      %p144 = scmp.eq.s32.totalorder %s20, 0
      %p145 = por %p143, %p144
      %s146 = ssub.s32 %s21, %s33
      %s147 = ssub.s32 %s22, %s29
      %s148 = sor.u32 %s146, %s147
      %p149 = scmp.eq.s32.totalorder %s148, 0
      %s151 = sadd.s32 %s150, 1
      %s152 = scalar_select %p149, %s150, %s151
      %p155 = pneg %p149
      %p156 = scmp.eq.s32.totalorder %s14, 1
      %p157 = por %p155, %p156
      %p158 = scmp.ne.s32.totalorder %s150, %s153
      %p159 = scmp.eq.s32.totalorder %s14, 0
      %p160 = por %p158, %p159
      %p161 = scmp.ne.s32.totalorder %s150, %s153
      %p162 = scmp.eq.s32.totalorder %s19, 1
      %p163 = por %p161, %p162
      %p164 = scmp.ne.s32.totalorder %s153, %s154
      %p165 = scmp.eq.s32.totalorder %s19, 0
      %p166 = por %p164, %p165
      %p167 = scmp.ne.s32.totalorder %s153, %s154
      %p168 = scmp.eq.s32.totalorder %s20, 1
      %p169 = por %p167, %p168
      %p171 = scmp.ne.s32.totalorder %s154, %s170
      %p172 = scmp.eq.s32.totalorder %s20, 0
      %p173 = por %p171, %p172
      %p174 = scmp.le.s32.totalorder 1, %s14
      %p175 = scmp.lt.s32.totalorder %s14, 3
      %p176 = pnand %p174, %p175
      %p177 = pneg %p176
      // Predicated region
      $region9: #{tpu_custom_call.1} parent=5 // pred_check
        _
      $region10: #{tpu_custom_call.1} parent=5 // pred_check_branch
        %179 = sbr.rel (%p176) target = $region12
      $region11: #{tpu_custom_call.1} parent=5 // pred_region
        %s180 = ssub.s32 %s14, 1
        // Predicated region
        $region13: #{tpu_custom_call.1} parent=11 // pred_check
          %p181 = pneg %p75
        $region14: #{tpu_custom_call.1} parent=11 // pred_check_branch
          %183 = sbr.rel (%p181) target = $region16
        $region15: #{tpu_custom_call.1} parent=11 // pred_region
          _
        $region16: #{tpu_custom_call.1} parent=11 // pred_fallthru
          _
        // Predicated region
        $region17: #{tpu_custom_call.1} parent=11 // pred_check
          %p184 = pneg %p96
        $region18: #{tpu_custom_call.1} parent=11 // pred_check_branch
          %186 = sbr.rel (%p184) target = $region20
        $region19: #{tpu_custom_call.1} parent=11 // pred_region
          _
        $region20: #{tpu_custom_call.1} parent=11 // pred_fallthru
          _
        // Predicated region
        $region21: #{tpu_custom_call.1} parent=11 // pred_check
          %p187 = pneg %p117
        $region22: #{tpu_custom_call.1} parent=11 // pred_check_branch
          %189 = sbr.rel (%p187) target = $region24
        $region23: #{tpu_custom_call.1} parent=11 // pred_region
          _
        $region24: #{tpu_custom_call.1} parent=11 // pred_fallthru
          _
        // Predicated region
        $region25: #{tpu_custom_call.1} parent=11 // pred_check
          %p190 = pneg %p138
        $region26: #{tpu_custom_call.1} parent=11 // pred_check_branch
          %192 = sbr.rel (%p190) target = $region28
        $region27: #{tpu_custom_call.1} parent=11 // pred_region
          _
        $region28: #{tpu_custom_call.1} parent=11 // pred_fallthru
          _
      $region12: #{tpu_custom_call.1} parent=5 // pred_fallthru
        _
      %p193 = scmp.lt.s32.totalorder %s14, 2
      // Predicated region
      $region29: #{tpu_custom_call.1} parent=5 // pred_check
        %p194 = pneg %p193
      $region30: #{tpu_custom_call.1} parent=5 // pred_check_branch
        %196 = sbr.rel (%p194) target = $region32
      $region31: #{tpu_custom_call.1} parent=5 // pred_region
        // Predicated region
        $region33: #{tpu_custom_call.1} parent=31 // pred_check
          %p197 = pneg %p48
        $region34: #{tpu_custom_call.1} parent=31 // pred_check_branch
          %199 = sbr.rel (%p197) target = $region36
        $region35: #{tpu_custom_call.1} parent=31 // pred_region
          %s200 = smul.u32 2, %s22
          %p201 = scmp.lt.s32.totalorder %s21, 1
          %s202 = scalar_select %p201, %s21, 1
          %p203 = scmp.lt.s32.totalorder %s200, 1
          %s204 = scalar_select %p203, %s200, 1
          %s205 = smul.addr %s202, 2
          %s206 = sadd.s32 %s204, %s205
          %s207 = smul.addr %s206, 4
          %s208 = scalar_lea.vmem %s0, %s207
          %s209 = smul.u32 2, %s22
        $region36: #{tpu_custom_call.1} parent=31 // pred_fallthru
          _
      $region32: #{tpu_custom_call.1} parent=5 // pred_fallthru
        _
      %p210 = scmp.le.s32.totalorder 1, %s14
      %p211 = scmp.lt.s32.totalorder %s14, 3
      %p212 = pnand %p210, %p211
      %p213 = pneg %p212
      // Predicated region
      $region37: #{tpu_custom_call.1} parent=5 // pred_check
        _
      $region38: #{tpu_custom_call.1} parent=5 // pred_check_branch
        %215 = sbr.rel (%p212) target = $region40
      $region39: #{tpu_custom_call.1} parent=5 // pred_region
        %s216 = ssub.s32 %s14, 1
        %s217 = smul.u32 2, %s24
        %p218 = scmp.lt.s32.totalorder %s23, 1
        %s219 = scalar_select %p218, %s23, 1
        %p220 = scmp.lt.s32.totalorder %s217, 1
        %s221 = scalar_select %p220, %s217, 1
        %s222 = smul.addr %s219, 2
        %s223 = sadd.s32 %s221, %s222
        %s224 = smul.addr %s223, 4
        %s225 = scalar_lea.vmem %s0, %s224
        %p226 = pneg %p54
        %p227 = pneg %p51
        %p228 = pneg %p75
        %p229 = pneg %p72
        %p230 = pneg %p96
        %p231 = pneg %p93
        %p232 = pneg %p117
        %p233 = pneg %p114
        %p234 = pneg %p138
        %p235 = pneg %p135
        %p236 = pneg %p166
        %p237 = pneg %p163
        %s238 = sand.u32 %s153, 1
        %s239 = scalar_lea.sflag [#allocation3], %s238
        %s240 = sand.u32 %s153, 1
        %s241 = smul.addr %s240, 8
        %s242 = scalar_lea.vmem [#allocation2], %s241
        %s243 = smul.u32 2, %s24
        %p244 = scmp.lt.s32.totalorder %s23, 1
        %s245 = scalar_select %p244, %s23, 1
        %p246 = scmp.lt.s32.totalorder %s243, 1
        %s247 = scalar_select %p246, %s243, 1
        %s248 = smul.addr %s245, 2
        %s249 = sadd.s32 %s247, %s248
        %s250 = smul.addr %s249, 4
        %s251 = scalar_lea.vmem %s0, %s250
        %s252 = smul.u32 2, %s24
        %s253 = smul.u32 2, %s24
        %v254 = vld [vmem:[%s1] sm:$0xff]
        %v255 = vld [vmem:[%s1 + $0x8] sm:$0xff]
        %v256 = vld [vmem:[%s251] sm:$0xff]
        %v257 = vld [vmem:[%s2] sm:$0xff]
        %v258 = vld [vmem:[%s2 + $0x8] sm:$0xff]
        %260 = vset.pattern.permute.xlu0 0
        %261 = vperm.xlu0 %260, %v257
        %v262 = vpop.permute.xlu0 %261
        %265 = vset.pattern.permute.xlu0 0
        %266 = vperm.xlu0 %265, %v258
        %v267 = vpop.permute.xlu0 %266
        %v270 = vcombine.high %v256, %v256
        %vm271 = vcmask 31744
        %v273 = vsel %vm271, %v254, 0
        %v276 = vsel %vm271, %v255, 0
        %vm278 = vcmask 1043456
        %v279 = vsel %vm278, %v256, 0
        %v281 = vsel %vm278, %v270, 0
        %283 = vmatprep.subr.mxu0 %v281
        %284 = vmatpush1.msra.mxu0 %v279
        %285 = vmatprep.subr.mxu0 0.0
        %286 = vmatpush1.msra.mxu0 0.0
        %287 = vmatprep.subr.mxu0 0.0
        %288 = vmatpush1.msra.mxu0 0.0
        %289 = vmatprep.subr.mxu0 0.0
        %290 = vmatpush1.msra.mxu0 0.0
        %291 = vmatprep.subr.mxu0 0.0
        %292 = vmatpush1.msra.mxu0 0.0
        %293 = vmatprep.subr.mxu0 0.0
        %294 = vmatpush1.msra.mxu0 0.0
        %295 = vmatprep.subr.mxu0 0.0
        %296 = vmatpush1.msra.mxu0 0.0
        %297 = vmatprep.subr.mxu0 0.0
        %298 = vmatpush1.msra.mxu0 0.0
        %299 = vmatprep.subr.mxu0 0.0
        %300 = vmatpush1.msra.mxu0 0.0
        %301 = vmatprep.subr.mxu0 0.0
        %302 = vmatpush1.msra.mxu0 0.0
        %303 = vmatprep.subr.mxu0 0.0
        %304 = vmatpush1.msra.mxu0 0.0
        %305 = vmatprep.subr.mxu0 0.0
        %306 = vmatpush1.msra.mxu0 0.0
        %307 = vmatprep.subr.mxu0 0.0
        %308 = vmatpush1.msra.mxu0 0.0
        %309 = vmatprep.subr.mxu0 0.0
        %310 = vmatpush1.msra.mxu0 0.0
        %311 = vmatprep.subr.mxu0 0.0
        %312 = vmatpush1.msra.mxu0 0.0
        %313 = vmatprep.subr.mxu0 0.0
        %314 = vmatpush1.msra.mxu0 0.0
        %315 = vmatprep.subr.mxu0 0.0
        %316 = vmatpush1.msra.mxu0 0.0
        %317 = vmatprep.subr.mxu0 0.0
        %318 = vmatpush1.msra.mxu0 0.0
        %319 = vmatprep.subr.mxu0 0.0
        %320 = vmatpush1.msra.mxu0 0.0
        %321 = vmatprep.subr.mxu0 0.0
        %322 = vmatpush1.msra.mxu0 0.0
        %323 = vmatprep.subr.mxu0 0.0
        %324 = vmatpush1.msra.mxu0 0.0
        %325 = vmatprep.subr.mxu0 0.0
        %326 = vmatpush1.msra.mxu0 0.0
        %327 = vmatprep.subr.mxu0 0.0
        %328 = vmatpush1.msra.mxu0 0.0
        %329 = vmatprep.subr.mxu0 0.0
        %330 = vmatpush1.msra.mxu0 0.0
        %331 = vmatprep.subr.mxu0 0.0
        %332 = vmatpush1.msra.mxu0 0.0
        %333 = vmatprep.subr.mxu0 0.0
        %334 = vmatpush1.msra.mxu0 0.0
        %335 = vmatprep.subr.mxu0 0.0
        %336 = vmatpush1.msra.mxu0 0.0
        %337 = vmatprep.subr.mxu0 0.0
        %338 = vmatpush1.msra.mxu0 0.0
        %339 = vmatprep.subr.mxu0 0.0
        %340 = vmatpush1.msra.mxu0 0.0
        %341 = vmatprep.subr.mxu0 0.0
        %342 = vmatpush1.msra.mxu0 0.0
        %343 = vmatprep.subr.mxu0 0.0
        %344 = vmatpush1.msra.mxu0 0.0
        %345 = vmatprep.subr.mxu0 0.0
        %346 = vmatpush1.msra.mxu0 0.0
        %347 = vmatprep.mubr.f32.mxu0 0.0
        %348 = vmatmul.mubr.f32.gmra.mrb[0].mxu0 %v273
        %v349 = vpop.f32.mrb[0].mxu0
        %v350 = vadd.f32 %v262, %v349
        %v351 = vpop.f32.mrb[0].mxu0
        %v352 = vadd.f32 %v262, %v351
        %353 = vmatprep.mubr.f32.mxu0 0.0
        %354 = vmatmul.mubr.f32.gmra.mrb[0].mxu0 %v276
        %v355 = vpop.f32.mrb[0].mxu0
        %v356 = vadd.f32 %v267, %v355
        %v357 = vpop.f32.mrb[0].mxu0
        %v358 = vadd.f32 %v267, %v357
        %359 = vdwg.mxu0
        %v360 = vmul.f32 %v350, 0.5
        %v361 = vmul.f32 %v352, 0.5
        %v362 = vmul.f32 %v356, 0.5
        %v363 = vmul.f32 %v358, 0.5
        %v364 = vmul.f32 %v350, 0.70710677
        %v365 = vmul.f32 %v352, 0.70710677
        %v366 = vmul.f32 %v356, 0.70710677
        %v367 = vmul.f32 %v358, 0.70710677
        %v368 = verf.f32.pop %v364
        %v369 = verf.f32.pop %v365
        %v370 = verf.f32.pop %v366
        %v371 = verf.f32.pop %v367
        %v372 = vadd.f32 %v368, 1.0
        %v373 = vadd.f32 %v369, 1.0
        %v374 = vadd.f32 %v370, 1.0
        %v375 = vadd.f32 %v371, 1.0
        %v376 = vmul.f32 %v360, %v372
        %v377 = vmul.f32 %v361, %v373
        %v378 = vmul.f32 %v362, %v374
        %v379 = vmul.f32 %v363, %v375
        %v380 = vld [vmem:[%s3] sm:$0xf]
        %v381 = vld [vmem:[%s4] sm:$0xf]
        %383 = vset.pattern.permute.xlu0 0
        %384 = vperm.xlu0 %383, %v381
        %v385 = vpop.permute.xlu0 %384
        %vm387 = vcmask 130048
        %v389 = vsel %vm387, %v380, 0
        %391 = vmatprep.subr.mxu0 %v377
        %392 = vmatpush1.msra.mxu0 %v376
        %393 = vmatprep.subr.mxu0 %v379
        %394 = vmatpush1.msra.mxu0 %v378
        %395 = vmatprep.subr.mxu0 0.0
        %396 = vmatpush1.msra.mxu0 0.0
        %397 = vmatprep.subr.mxu0 0.0
        %398 = vmatpush1.msra.mxu0 0.0
        %399 = vmatprep.subr.mxu0 0.0
        %400 = vmatpush1.msra.mxu0 0.0
        %401 = vmatprep.subr.mxu0 0.0
        %402 = vmatpush1.msra.mxu0 0.0
        %403 = vmatprep.subr.mxu0 0.0
        %404 = vmatpush1.msra.mxu0 0.0
        %405 = vmatprep.subr.mxu0 0.0
        %406 = vmatpush1.msra.mxu0 0.0
        %407 = vmatprep.subr.mxu0 0.0
        %408 = vmatpush1.msra.mxu0 0.0
        %409 = vmatprep.subr.mxu0 0.0
        %410 = vmatpush1.msra.mxu0 0.0
        %411 = vmatprep.subr.mxu0 0.0
        %412 = vmatpush1.msra.mxu0 0.0
        %413 = vmatprep.subr.mxu0 0.0
        %414 = vmatpush1.msra.mxu0 0.0
        %415 = vmatprep.subr.mxu0 0.0
        %416 = vmatpush1.msra.mxu0 0.0
        %417 = vmatprep.subr.mxu0 0.0
        %418 = vmatpush1.msra.mxu0 0.0
        %419 = vmatprep.subr.mxu0 0.0
        %420 = vmatpush1.msra.mxu0 0.0
        %421 = vmatprep.subr.mxu0 0.0
        %422 = vmatpush1.msra.mxu0 0.0
        %423 = vmatprep.subr.mxu0 0.0
        %424 = vmatpush1.msra.mxu0 0.0
        %425 = vmatprep.subr.mxu0 0.0
        %426 = vmatpush1.msra.mxu0 0.0
        %427 = vmatprep.subr.mxu0 0.0
        %428 = vmatpush1.msra.mxu0 0.0
        %429 = vmatprep.subr.mxu0 0.0
        %430 = vmatpush1.msra.mxu0 0.0
        %431 = vmatprep.subr.mxu0 0.0
        %432 = vmatpush1.msra.mxu0 0.0
        %433 = vmatprep.subr.mxu0 0.0
        %434 = vmatpush1.msra.mxu0 0.0
        %435 = vmatprep.subr.mxu0 0.0
        %436 = vmatpush1.msra.mxu0 0.0
        %437 = vmatprep.subr.mxu0 0.0
        %438 = vmatpush1.msra.mxu0 0.0
        %439 = vmatprep.subr.mxu0 0.0
        %440 = vmatpush1.msra.mxu0 0.0
        %441 = vmatprep.subr.mxu0 0.0
        %442 = vmatpush1.msra.mxu0 0.0
        %443 = vmatprep.subr.mxu0 0.0
        %444 = vmatpush1.msra.mxu0 0.0
        %445 = vmatprep.subr.mxu0 0.0
        %446 = vmatpush1.msra.mxu0 0.0
        %447 = vmatprep.subr.mxu0 0.0
        %448 = vmatpush1.msra.mxu0 0.0
        %449 = vmatprep.subr.mxu0 0.0
        %450 = vmatpush1.msra.mxu0 0.0
        %451 = vmatprep.subr.mxu0 0.0
        %452 = vmatpush1.msra.mxu0 0.0
        %453 = vmatprep.subr.mxu0 0.0
        %454 = vmatpush1.msra.mxu0 0.0
        %455 = vmatprep.mubr.f32.mxu0 0.0
        %456 = vmatmul.mubr.f32.gmra.mrb[0].mxu0 %v389
        %v457 = vpop.f32.mrb[0].mxu0
        %v458 = vadd.f32 %v385, %v457
        %v459 = vpop.f32.mrb[0].mxu0
        %v460 = vadd.f32 %v385, %v459
        %461 = vdwg.mxu0
        %v464 = vcombine.low %v458, %v460
        %466 = vst [vmem:[%s242] sm:$0xff] %v464
        %s467 = sand.u32 %s153, 1
        %s468 = scalar_lea.sflag [#allocation3], %s467
        %s469 = sand.u32 %s153, 1
        %s470 = smul.addr %s469, 8
        %s471 = scalar_lea.vmem [#allocation2], %s470
        // Predicated region
        $region41: #{tpu_custom_call.1} parent=39 // pred_check
          %p472 = pneg %p163
        $region42: #{tpu_custom_call.1} parent=39 // pred_check_branch
          %474 = sbr.rel (%p472) target = $region44
        $region43: #{tpu_custom_call.1} parent=39 // pred_region
          %s475 = smul.u32 2, %s24
          %s477 = ssub.s32 128, 128
          %478 = vsyncadd %s468, %s477
          %s479 = smul.addr %s23, 2
          %s480 = sadd.s32 %s475, %s479
          %s481 = smul.addr %s480, 64
          %s482 = scalar_lea.hbm %s5, %s481
          %s484 = sshll.u32 %s471, 4
          %s485 = int_to_ptr.vmem [resolvable:$true] %s484
          %487 = dma.vmem_to_hbm [thread:$0]  %s485, 128, %s482, %s468
        $region44: #{tpu_custom_call.1} parent=39 // pred_fallthru
          _
      $region40: #{tpu_custom_call.1} parent=5 // pred_fallthru
        _
      %p488 = scmp.le.s32.totalorder 2, %s14
      // Predicated region
      $region45: #{tpu_custom_call.1} parent=5 // pred_check
        %p489 = pneg %p488
      $region46: #{tpu_custom_call.1} parent=5 // pred_check_branch
        %491 = sbr.rel (%p489) target = $region48
      $region47: #{tpu_custom_call.1} parent=5 // pred_region
        %s492 = ssub.s32 %s14, 2
        // Predicated region
        $region49: #{tpu_custom_call.1} parent=47 // pred_check
          %p493 = pneg %p169
        $region50: #{tpu_custom_call.1} parent=47 // pred_check_branch
          %495 = sbr.rel (%p493) target = $region52
        $region51: #{tpu_custom_call.1} parent=47 // pred_region
          %s496 = sand.u32 %s154, 1
          %s497 = scalar_lea.sflag [#allocation3], %s496
          %s498 = sand.u32 %s154, 1
          %s499 = smul.addr %s498, 8
          %s500 = scalar_lea.vmem [#allocation2], %s499
          %501 = dma.done %s497, 128
        $region52: #{tpu_custom_call.1} parent=47 // pred_fallthru
          _
      $region48: #{tpu_custom_call.1} parent=5 // pred_fallthru
        _
    $region6: #{tpu_custom_call.1} parent=1 // loop_footer
      %s18 = sadd.s32 1, %s14
    $region7: #{tpu_custom_call.1} parent=1 // loop_footer_branch
      %13 = sbr.rel target = $region3
    $region8: #{tpu_custom_call.1} parent=1 // loop_exit
      _
    %502 = vsyncpa [#allocation3], 1
    %s503 = scalar_lea.sflag [#allocation3], 1
    %504 = vsyncpa %s503, 1

</llo_original>
